<compile_context>
chip_gen: v6e
topology: v6e:2x2x1
jax: 0.10.0
libtpu: 0.0.40
codegen_flags: <defaults>
</compile_context>

<pallas_src>
import jax
import jax.numpy as jnp
from jax.experimental import pallas as pl
from jax.experimental.pallas import tpu as pltpu

EMBED = 32
HIDDEN = 32          # must equal EMBED for the broadcast add (as in forge config)
VAR_RANGE = 16       # node.Discrete range
VAR_MIN = 1          # node.Discrete min

GROUPS = 8                         # embeddings packed per lane-dense output row
LANE_D = GROUPS * EMBED            # 256 output lanes per packed row (2 x 128)
MAX_TILE_ROWS = 2048               # packed rows per grid step (2 MiB output block)
MIN_TILE_ROWS = 256                # don't shrink tiles below this when splitting
TARGET_GRID_STEPS = 4              # >=4 steps on big N (v7x: 2 TCs + pipelining)
VMEM_LIMIT_BYTES = 32 * 1024 * 1024  # explicit; estimated peak ~9 MiB at max tile


# ---------------------------------------------------------------------------
# Continuous path (lane-dense):
#   o[r, :] = x[r, :] @ Wblk + c,   Wblk = kron(I_8, W^T) (8, 256),
#   c = tile(lin_bias + pos_bias)   (1, 256)
# ---------------------------------------------------------------------------
def _continuous_kernel(x_ref, wblk_ref, c_ref, o_ref):
    # x_ref: (TILE, 8) f32, wblk_ref: (8, 256), c_ref: (1, 256), o_ref: (TILE, 256)
    o_ref[...] = (
        jnp.dot(x_ref[...], wblk_ref[...], preferred_element_type=jnp.float32)
        + c_ref[...]
    )


# ---------------------------------------------------------------------------
# Discrete path (lane-dense, single-pass one-hot):
#   expanded[r, c] = idx[r, c // 16]   (one tiny MXU dot, no VALU loop)
#   onehot[r, c]   = (expanded[r, c] == c % 16)   -> also zeroes OOB indices
#   o[r, :]        = onehot[r, :] @ kron(I_8, emb_table + pos_bias)
# ---------------------------------------------------------------------------
def _discrete_kernel(idx_ref, expand_ref, colmod_ref, table_ref, o_ref):
    # idx_ref:    (TILE, 8)  int32 raw indices
    # expand_ref: (8, 128)   f32 = kron(I_8, ones(1, 16))   (resident constant)
    # colmod_ref: (1, 128)   f32 = iota(128) % 16           (resident constant)
    # table_ref:  (128, 256) f32 = kron(I_8, emb + bias)    (resident constant)
    idx = (idx_ref[...] - VAR_MIN).astype(jnp.float32)                 # (TILE, 8)
    expanded = jnp.dot(idx, expand_ref[...],
                       preferred_element_type=jnp.float32)             # (TILE, 128)
    # Equality against col_mod implies 0 <= idx < VAR_RANGE, so out-of-range
    # indices yield an all-zero row (documented deviation from torch).
    onehot = (expanded == colmod_ref[...]).astype(jnp.float32)         # (TILE, 128)
    o_ref[...] = jnp.dot(onehot, table_ref[...],
                         preferred_element_type=jnp.float32)


# ---------------------------------------------------------------------------
# Wrapper plumbing
# ---------------------------------------------------------------------------
def _round_up(x, m):
    return (x + m - 1) // m * m


def _choose_tile(rows_pad):
    """Packed-row tile: big enough to amortize per-step pipeline overhead,
    small enough to bound VMEM (v7x) and to give >= TARGET_GRID_STEPS steps
    for large N (two v7x TensorCores + pipelining overlap)."""
    if rows_pad <= MIN_TILE_ROWS:
        return rows_pad                       # tiny problem: single step
    tile = _round_up(pl.cdiv(rows_pad, TARGET_GRID_STEPS), 8)
    return max(MIN_TILE_ROWS, min(MAX_TILE_ROWS, tile))


def _pack_rows(x_flat, pad_value, dtype):
    """Pad a flat (N,) input only to a sublane-aligned row count and view it as
    a (rows_pad, GROUPS) slab; ragged last grid blocks are masked by Pallas."""
    n = x_flat.shape[0]
    rows = pl.cdiv(n, GROUPS)
    rows_pad = _round_up(max(rows, 1), 8)
    n_pad = rows_pad * GROUPS
    x_flat = jnp.pad(x_flat.astype(dtype), (0, n_pad - n), constant_values=pad_value)
    return x_flat.reshape(rows_pad, GROUPS), rows_pad


def _run(kernel, x_slab, params, rows_pad):
    tile = _choose_tile(rows_pad)
    in_specs = [pl.BlockSpec((tile, GROUPS), lambda i: (i, 0))]
    for p in params:                          # tiny resident parameter blocks
        in_specs.append(pl.BlockSpec(p.shape, lambda i: (0, 0)))
    return pl.pallas_call(
        kernel,
        out_shape=jax.ShapeDtypeStruct((rows_pad, LANE_D), jnp.float32),
        grid_spec=pltpu.PrefetchScalarGridSpec(
            num_scalar_prefetch=0,
            grid=(pl.cdiv(rows_pad, tile),),  # ragged last block handled by Pallas
            in_specs=in_specs,
            out_specs=pl.BlockSpec((tile, LANE_D), lambda i: (i, 0)),
        ),
        compiler_params=pltpu.CompilerParams(
            dimension_semantics=("parallel",),
            vmem_limit_bytes=VMEM_LIMIT_BYTES,
        ),
    )(x_slab, *params)


def _unpack(out, n, b, t):
    # NOTE: not a free reshape on TPU -- this relayouts the packed 256-lane rows
    # into 32-wide (lane-padded) rows through HBM.  Prefer return_packed=True
    # when the downstream consumer can use the (rows, 256) slab directly.
    return out.reshape(-1, EMBED)[:n].reshape(b, t, EMBED)


def biased_input_continuous(x, lin_w, lin_b, pos_bias, *, return_packed=False):
    # x: (B, T) float; lin_w: (EMBED, 1); lin_b: (EMBED,); pos_bias: (1, HIDDEN)
    assert EMBED == HIDDEN and pos_bias.shape == (1, HIDDEN)
    B, T = x.shape
    N = B * T
    # One-time tiny parameter preprocessing (lane-dense, biases folded).
    wblk = jnp.kron(jnp.eye(GROUPS, dtype=jnp.float32),
                    lin_w[:, 0].astype(jnp.float32)[None, :])                # (8, 256)
    c = jnp.tile((lin_b.astype(jnp.float32)
                  + pos_bias[0].astype(jnp.float32))[None, :], (1, GROUPS))  # (1, 256)
    x_slab, rows_pad = _pack_rows(x.reshape(N), 0.0, jnp.float32)
    out = _run(_continuous_kernel, x_slab, (wblk, c), rows_pad)
    if return_packed:
        return out, N
    return _unpack(out, N, B, T)


def biased_input_discrete(x, emb_table, pos_bias, *, return_packed=False):
    # x: (B, T) int; emb_table: (R, EMBED); pos_bias: (1, HIDDEN)
    assert EMBED == HIDDEN and pos_bias.shape == (1, HIDDEN)
    B, T = x.shape
    N = B * T
    # Fold positional bias into the table; block-diagonalize for lane-dense out.
    table_blk = jnp.kron(jnp.eye(GROUPS, dtype=jnp.float32),
                         emb_table.astype(jnp.float32)
                         + pos_bias.astype(jnp.float32))                     # (128, 256)
    expand = jnp.kron(jnp.eye(GROUPS, dtype=jnp.float32),
                      jnp.ones((1, VAR_RANGE), jnp.float32))                 # (8, 128)
    colmod = (jnp.arange(GROUPS * VAR_RANGE, dtype=jnp.int32) % VAR_RANGE
              ).astype(jnp.float32)[None, :]                                 # (1, 128)
    x_slab, rows_pad = _pack_rows(x.reshape(N), VAR_MIN, jnp.int32)
    out = _run(_discrete_kernel, x_slab, (expand, colmod, table_blk), rows_pad)
    if return_packed:
        return out, N
    return _unpack(out, N, B, T)


if __name__ == "__main__":
    key = jax.random.PRNGKey(0)
    k1, k2, k3, k4, k5 = jax.random.split(key, 5)

    # --- deterministic parameters (synthetic init, no checkpoint load) ---
    lin_w = jax.random.normal(k1, (EMBED, 1), jnp.float32) * 0.1      # Linear(1, EMBED)
    lin_b = jax.random.normal(k2, (EMBED,), jnp.float32) * 0.1
    emb_table = jax.random.normal(k3, (VAR_RANGE, EMBED), jnp.float32) * 0.1
    pos_bias = jax.random.normal(k4, (1, HIDDEN), jnp.float32) * 0.1  # Embedding(1, HIDDEN)

    ok = True
    # (2, 8): N multiple of GROUPS; (3, 7): wrapper padding (N % 8 != 0);
    # (5, 413): multi-step grid with a ragged last block.
    for (B, T) in [(2, 8), (3, 7), (5, 413)]:
        kk1, kk2 = jax.random.split(jax.random.fold_in(k5, B * 1000 + T), 2)
        x_cont = jax.random.normal(kk1, (B, T), jnp.float32)
        x_disc = jax.random.randint(kk2, (B, T), VAR_MIN, VAR_MIN + VAR_RANGE,
                                    dtype=jnp.int32)

        out_cont = jax.block_until_ready(
            biased_input_continuous(x_cont, lin_w, lin_b, pos_bias))
        out_disc = jax.block_until_ready(
            biased_input_discrete(x_disc, emb_table, pos_bias))

        # --- pure-JAX references ---
        ref_cont = x_cont[..., None] * lin_w[:, 0] + lin_b + pos_bias[0]
        ref_disc = emb_table[x_disc - VAR_MIN] + pos_bias[0]

        ok &= out_cont.shape == (B, T, HIDDEN) and out_disc.shape == (B, T, HIDDEN)
        ok &= bool(jnp.allclose(out_cont, ref_cont, atol=1e-5))
        ok &= bool(jnp.allclose(out_disc, ref_disc, atol=1e-5))

    assert ok, "mismatch vs reference"
    print("KERNEL_OK")
</pallas_src>

<mosaic_0001>
module attributes {stable_mosaic.version = 11 : i64} {
  func.func @_continuous_kernel(%arg0: i32, %arg1: memref<8x8xf32, #tpu.memory_space<vmem>>, %arg2: memref<8x256xf32, #tpu.memory_space<vmem>>, %arg3: memref<1x256xf32, #tpu.memory_space<vmem>>, %arg4: memref<8x256xf32, #tpu.memory_space<vmem>>) attributes {dimension_semantics = [#tpu.dimension_semantics<parallel>], iteration_bounds = array<i64: 1>, scalar_prefetch = 0 : i64, scratch_operands = 0 : i64, tpu.core_type = #tpu.core_type<tc>, window_params = [{transform_indices = @transform_0, window_bounds = array<i64: 8, 8>}, {pipeline_mode = #tpu.pipeline_mode<synchronous>, transform_indices = @transform_1, window_bounds = array<i64: 8, 256>}, {pipeline_mode = #tpu.pipeline_mode<synchronous>, transform_indices = @transform_2, window_bounds = array<i64: 1, 256>}, {transform_indices = @transform_3, window_bounds = array<i64: 8, 256>}]} {
    %c0 = arith.constant 0 : index
    %c0_0 = arith.constant 0 : index
    %0 = vector.load %arg1[%c0, %c0_0] : memref<8x8xf32, #tpu.memory_space<vmem>>, vector<8x8xf32>
    %c0_1 = arith.constant 0 : index
    %c0_2 = arith.constant 0 : index
    %1 = vector.load %arg2[%c0_1, %c0_2] : memref<8x256xf32, #tpu.memory_space<vmem>>, vector<8x256xf32>
    %cst = arith.constant dense<0.000000e+00> : vector<8x256xf32>
    %2 = tpu.matmul %0, %1, %cst {dimension_numbers = #tpu.dot_dimension_numbers<[1], [0], [0], [1], [0, 0, 1, 1], [], []>} : vector<8x8xf32>, vector<8x256xf32>, vector<8x256xf32> -> vector<8x256xf32>
    %c0_3 = arith.constant 0 : index
    %c0_4 = arith.constant 0 : index
    %3 = vector.load %arg3[%c0_3, %c0_4] : memref<1x256xf32, #tpu.memory_space<vmem>>, vector<1x256xf32>
    %4 = vector.broadcast %3 : vector<1x256xf32> to vector<8x256xf32>
    %5 = arith.addf %2, %4 : vector<8x256xf32>
    %c0_5 = arith.constant 0 : index
    %c0_6 = arith.constant 0 : index
    %6 = vector.load %arg4[%c0_5, %c0_6] : memref<8x256xf32, #tpu.memory_space<vmem>>, vector<8x256xf32>
    tpu.vector_store %arg4[%c0_5, %c0_6], %5 {strides = array<i32>} : memref<8x256xf32, #tpu.memory_space<vmem>>, vector<8x256xf32>,
    return
  }
  func.func @transform_0(%arg0: i32) -> (i32, i32) {
    %c0_i32 = arith.constant 0 : i32
    %c0_i32_0 = arith.constant 0 : i32
    return %arg0, %c0_i32 : i32, i32
  }
  func.func @transform_1(%arg0: i32) -> (i32, i32) {
    %c0_i32 = arith.constant 0 : i32
    %c0_i32_0 = arith.constant 0 : i32
    %c0_i32_1 = arith.constant 0 : i32
    return %c0_i32, %c0_i32_0 : i32, i32
  }
  func.func @transform_2(%arg0: i32) -> (i32, i32) {
    %c0_i32 = arith.constant 0 : i32
    %c0_i32_0 = arith.constant 0 : i32
    %c0_i32_1 = arith.constant 0 : i32
    return %c0_i32, %c0_i32_0 : i32, i32
  }
  func.func @transform_3(%arg0: i32) -> (i32, i32) {
    %c0_i32 = arith.constant 0 : i32
    %c0_i32_0 = arith.constant 0 : i32
    return %arg0, %c0_i32 : i32, i32
  }
}

</mosaic_0001>

<llo_original>
// kernel: tpu_custom_call.1
$region0: #{tpu_custom_call.1}
  #allocation0 [shape = 'u32[]', space=smem, size = 0x4, offset = 0x4, fixed_abs, tag = 'smem constant byte address 0x4 - core index']
  #allocation1 [shape = 'u32[144,128]{1,0:T(1,128)}', space=vmem, size = 0x12000, scoped, tag = 'internal scratch']
  %s0 = inlined_call_operand.hbm [shape: f32[8,8], index: 0, kind: input, shape index: {}]
  %s1 = inlined_call_operand.hbm [shape: f32[8,256], index: 1, kind: input, shape index: {}]
  %s2 = inlined_call_operand.vmem [shape: f32[1,256], index: 2, kind: input, shape index: {}]
  %s3 = inlined_call_operand.hbm [shape: f32[8,256], index: 3, kind: output, shape index: {}]
  %s4 = sld [smem:[#allocation0]]
  $region30: #{tpu_custom_call.1} parent=0
    _
  %s6 = ssub.s32 1, %s4
  %s7 = scalar_select 0, %s6, %s4
  $region1: #{tpu_custom_call.1} parent=0
    #allocation2 [shape = 'u8[4096]{0}', space=vmem, size = 0x1000, scoped, tag = 'input window, operand 0, single buffered']
    #allocation3 [shape = 's32[1]{0}', space=sflag, size = 0x4, scoped, tag = 'scoped memory for tpu_custom_call.1']
    #allocation4 [shape = 's32[1]{0}', space=sflag, size = 0x4, scoped, tag = 'scoped memory for tpu_custom_call.1']
    #allocation5 [shape = 'u8[8192]{0}', space=vmem, size = 0x2000, scoped, tag = 'input window, operand 1, single buffered']
    #allocation6 [shape = 's32[1]{0}', space=sflag, size = 0x4, scoped, tag = 'scoped memory for tpu_custom_call.1']
    #allocation7 [shape = 'u8[8192]{0}', space=vmem, size = 0x2000, scoped, tag = 'output window, operand 0, single buffered']
    %8 = vsyncpa [#allocation3], 0
    %9 = vsyncpa [#allocation6], 0
    %10 = vsyncpa [#allocation4], 0
    // Predicated region
    $region2: #{tpu_custom_call.1} parent=1 // pred_check
      _
    $region3: #{tpu_custom_call.1} parent=1 // pred_check_branch
      %12 = sbr.rel (0) target = $region5
    $region4: #{tpu_custom_call.1} parent=1 // pred_region
      %s14 = ssub.s32 128, 128
      %15 = vsyncadd [#allocation3], %s14
      %s17 = sshll.u32 [#allocation2], 4
      %s18 = int_to_ptr.vmem [resolvable:$true] %s17
      %20 = dma.hbm_to_vmem [thread:$0]  %s0, 128, %s18, [#allocation3]
    $region5: #{tpu_custom_call.1} parent=1 // pred_fallthru
      _
    // Predicated region
    $region6: #{tpu_custom_call.1} parent=1 // pred_check
      _
    $region7: #{tpu_custom_call.1} parent=1 // pred_check_branch
      %22 = sbr.rel (0) target = $region9
    $region8: #{tpu_custom_call.1} parent=1 // pred_region
      %s24 = ssub.s32 256, 256
      %25 = vsyncadd [#allocation6], %s24
      %s27 = sshll.u32 [#allocation5], 4
      %s28 = int_to_ptr.vmem [resolvable:$true] %s27
      %30 = dma.hbm_to_vmem [thread:$0]  %s1, 256, %s28, [#allocation6]
    $region9: #{tpu_custom_call.1} parent=1 // pred_fallthru
      _
    // Predicated region
    $region10: #{tpu_custom_call.1} parent=1 // pred_check
      _
    $region11: #{tpu_custom_call.1} parent=1 // pred_check_branch
      %32 = sbr.rel (0) target = $region13
    $region12: #{tpu_custom_call.1} parent=1 // pred_region
      _
    $region13: #{tpu_custom_call.1} parent=1 // pred_fallthru
      _
    // Predicated region
    $region14: #{tpu_custom_call.1} parent=1 // pred_check
      _
    $region15: #{tpu_custom_call.1} parent=1 // pred_check_branch
      %34 = sbr.rel (0) target = $region17
    $region16: #{tpu_custom_call.1} parent=1 // pred_region
      %35 = dma.done [#allocation3], 128
    $region17: #{tpu_custom_call.1} parent=1 // pred_fallthru
      _
    // Predicated region
    $region18: #{tpu_custom_call.1} parent=1 // pred_check
      _
    $region19: #{tpu_custom_call.1} parent=1 // pred_check_branch
      %37 = sbr.rel (0) target = $region21
    $region20: #{tpu_custom_call.1} parent=1 // pred_region
      %38 = dma.done [#allocation6], 256
    $region21: #{tpu_custom_call.1} parent=1 // pred_fallthru
      _
    %v39 = vld [vmem:[#allocation2] sm:$0xff]
    %v40 = vld [vmem:[#allocation5] sm:$0xff]
    %v41 = vld [vmem:[#allocation5 + $0x8] sm:$0xff]
    %v42 = vld [vmem:[%s2] sm:$0x3]
    %v44 = vlaneseq
    %v45 = vshrl.u32 %v44, 7
    %v46 = vsub.s32 0, %v45
    %v47 = vrot.slane %v42, %v46
    %v48 = vlaneseq
    %v49 = vshrl.u32 %v48, 7
    %v50 = vsub.s32 1, %v49
    %v51 = vrot.slane %v42, %v50
    %vm54 = vcmask 64512
    %v56 = vsel %vm54, %v39, 0
    %58 = vmatprep.subr.mxu0 0.0
    %59 = vmatpush1.msra.mxu0 0.0
    %60 = vmatprep.subr.mxu0 0.0
    %61 = vmatpush1.msra.mxu0 0.0
    %62 = vmatprep.subr.mxu0 0.0
    %63 = vmatpush1.msra.mxu0 0.0
    %64 = vmatprep.subr.mxu0 0.0
    %65 = vmatpush1.msra.mxu0 0.0
    %66 = vmatprep.subr.mxu0 0.0
    %67 = vmatpush1.msra.mxu0 0.0
    %68 = vmatprep.subr.mxu0 0.0
    %69 = vmatpush1.msra.mxu0 0.0
    %70 = vmatprep.subr.mxu0 0.0
    %71 = vmatpush1.msra.mxu0 0.0
    %72 = vmatprep.subr.mxu0 0.0
    %73 = vmatpush1.msra.mxu0 0.0
    %74 = vmatprep.subr.mxu0 0.0
    %75 = vmatpush1.msra.mxu0 0.0
    %76 = vmatprep.subr.mxu0 0.0
    %77 = vmatpush1.msra.mxu0 0.0
    %78 = vmatprep.subr.mxu0 0.0
    %79 = vmatpush1.msra.mxu0 0.0
    %80 = vmatprep.subr.mxu0 0.0
    %81 = vmatpush1.msra.mxu0 0.0
    %82 = vmatprep.subr.mxu0 0.0
    %83 = vmatpush1.msra.mxu0 0.0
    %84 = vmatprep.subr.mxu0 0.0
    %85 = vmatpush1.msra.mxu0 0.0
    %86 = vmatprep.subr.mxu0 0.0
    %87 = vmatpush1.msra.mxu0 0.0
    %88 = vmatprep.subr.mxu0 %v41
    %89 = vmatpush1.msra.mxu0 %v40
    %90 = vmatprep.subr.mxu0 0.0
    %91 = vmatpush2.msra.mxu0 0.0
    %92 = vmatprep.subr.mxu0 0.0
    %93 = vmatpush2.msra.mxu0 0.0
    %94 = vmatprep.subr.mxu0 0.0
    %95 = vmatpush2.msra.mxu0 0.0
    %96 = vmatprep.subr.mxu0 0.0
    %97 = vmatpush2.msra.mxu0 0.0
    %98 = vmatprep.subr.mxu0 0.0
    %99 = vmatpush2.msra.mxu0 0.0
    %100 = vmatprep.subr.mxu0 0.0
    %101 = vmatpush2.msra.mxu0 0.0
    %102 = vmatprep.subr.mxu0 0.0
    %103 = vmatpush2.msra.mxu0 0.0
    %104 = vmatprep.subr.mxu0 0.0
    %105 = vmatpush2.msra.mxu0 0.0
    %106 = vmatprep.subr.mxu0 0.0
    %107 = vmatpush2.msra.mxu0 0.0
    %108 = vmatprep.subr.mxu0 0.0
    %109 = vmatpush2.msra.mxu0 0.0
    %110 = vmatprep.subr.mxu0 0.0
    %111 = vmatpush2.msra.mxu0 0.0
    %112 = vmatprep.subr.mxu0 0.0
    %113 = vmatpush2.msra.mxu0 0.0
    %114 = vmatprep.subr.mxu0 0.0
    %115 = vmatpush2.msra.mxu0 0.0
    %116 = vmatprep.subr.mxu0 0.0
    %117 = vmatpush2.msra.mxu0 0.0
    %118 = vmatprep.subr.mxu0 0.0
    %119 = vmatpush2.msra.mxu0 0.0
    %120 = vmatprep.subr.mxu0 0.0
    %121 = vmatpush2.msra.mxu0 0.0
    %122 = vmatprep.mubr.f32.mxu0 0.0
    %123 = vmatmul.mubr.f32.gmra.mxu0 %v56
    %v124 = vpop.f32.mrf.mxu0
    %v125 = vadd.f32 %v47, %v124
    %v126 = vpop.f32.mrf.mxu0
    %v127 = vadd.f32 %v51, %v126
    %128 = vdwg.mxu0
    %129 = vst [vmem:[#allocation7] sm:$0xff] %v125
    %130 = vst [vmem:[#allocation7 + $0x8] sm:$0xff] %v127
    // Predicated region
    $region22: #{tpu_custom_call.1} parent=1 // pred_check
      _
    $region23: #{tpu_custom_call.1} parent=1 // pred_check_branch
      %132 = sbr.rel (0) target = $region25
    $region24: #{tpu_custom_call.1} parent=1 // pred_region
      %s134 = ssub.s32 256, 256
      %135 = vsyncadd [#allocation4], %s134
      %s137 = sshll.u32 [#allocation7], 4
      %s138 = int_to_ptr.vmem [resolvable:$true] %s137
      %140 = dma.vmem_to_hbm [thread:$0]  %s138, 256, %s3, [#allocation4]
    $region25: #{tpu_custom_call.1} parent=1 // pred_fallthru
      _
    // Predicated region
    $region26: #{tpu_custom_call.1} parent=1 // pred_check
      _
    $region27: #{tpu_custom_call.1} parent=1 // pred_check_branch
      %142 = sbr.rel (0) target = $region29
    $region28: #{tpu_custom_call.1} parent=1 // pred_region
      %143 = dma.done [#allocation4], 256
    $region29: #{tpu_custom_call.1} parent=1 // pred_fallthru
      _
    %144 = vsyncpa [#allocation3], 1
    %145 = vsyncpa [#allocation6], 1
    %146 = vsyncpa [#allocation4], 1

</llo_original>
